<compile_context>
chip_gen: v5e
topology: v5e:2x2
jax: 0.10.0
libtpu: 0.0.40
codegen_flags: <defaults>
</compile_context>

<pallas_src>
import jax
import jax.numpy as jnp
from jax.experimental import pallas as pl
from jax.experimental.pallas import tpu as pltpu

N_AUG = 4                      # number of differentiable augmentations in the ModuleList
LANE_CAP = 8192                # max lane width of a block
BLOCK_BYTES = 4 * 1024 * 1024  # per-block budget (x / out each); 2x double-buffered


def _aug_layer_kernel(sb_ref, x_ref, o_ref):
    """Per-row affine: o = x * s + b.

    sb_ref: (TR, 2)  f32  VMEM  -- [:,0] folded scale (= one_hot @ scales),
                                   [:,1] folded bias  (= one_hot @ biases)
    x_ref:  (TR, TL) VMEM       -- lane-dense input slab tile
    o_ref:  (TR, TL) VMEM
    """
    s = sb_ref[:, 0:1]
    b = sb_ref[:, 1:2]
    # TODO(synk): on v6e/v7x a bf16 FMA path (skipping the f32 upcast) is possible;
    # kept f32 so the same kernel is valid on v5e (no bf16 VALU) -- HBM-bound anyway.
    x = x_ref[...].astype(jnp.float32)
    o_ref[...] = (x * s + b).astype(o_ref.dtype)


def _round_up(n, m):
    return ((n + m - 1) // m) * m


def _slab_lane_width(P, cap):
    """Largest multiple of 128 that divides P and is <= cap, or None if P % 128 != 0."""
    if P % 128 != 0:
        return None
    c = (min(cap, P) // 128) * 128
    for t in range(c, 127, -128):
        if P % t == 0:
            return t
    return 128


def _pick_tiles(R, L, dtype):
    """Dtype-aware (row, lane) tile for a (R, L) slab, ~BLOCK_BYTES per block."""
    itemsize = jnp.dtype(dtype).itemsize
    sub = max(8, 32 // itemsize)          # packed sublanes: 8 f32, 16 bf16, 32 int8/fp8
    tl = min(_round_up(L, 128), LANE_CAP)
    max_rows = max(sub, (BLOCK_BYTES // (tl * itemsize)) // sub * sub)
    if R <= sub:
        tr = R                            # tiny: full extent (satisfies block rule)
    else:
        tr = min(_round_up(R, sub), max_rows)
    return tr, tl


def aug_layer_forward(x_nchw, aug_oh, soft_augs, scales, biases):
    """JAX wrapper reproducing AugLayer.forward.

    x_nchw:   (B, C, H, W)                 any float dtype (kept end-to-end)
    aug_oh:   (N_AUG,) or (B, N_AUG)       one-hot (or relaxed) weights
    soft_augs: same shape as aug_oh; only used by SoftMultFunction's backward in
               the original module -> forward output identical, unused here.
    scales, biases: (N_AUG,)               per-augmentation affine parameters.
    """
    B, C, H, W = x_nchw.shape
    P = C * H * W

    one_hot = aug_oh
    if one_hot.ndim == 1:
        # one_hot = one_hot.repeat(batch_size, 1)  (soft_augs repeated identically)
        one_hot = jnp.broadcast_to(one_hot[None, :], (B, one_hot.shape[0]))
    # TODO(synk): soft_augs / calc_soft_mult_grads only change the backward pass
    # (custom autograd Function); the forward value is identical, so it is unused.

    one_hot = one_hot.astype(jnp.float32)
    # Fold the augmentation loop:
    #   sum_i oh[:, i] * (scale_i * x + bias_i) = (oh @ scales) * x + (oh @ biases)
    eff_scale = one_hot @ scales.astype(jnp.float32)       # (B,)
    eff_bias = one_hot @ biases.astype(jnp.float32)        # (B,)
    sb = jnp.stack([eff_scale, eff_bias], axis=-1)         # (B, 2)

    # Reshape to a lane-dense slab when possible so tiles stay sublane/lane dense
    # for any batch size.
    lane = _slab_lane_width(P, LANE_CAP)
    if lane is not None:
        rows_per_img = P // lane
        R, L = B * rows_per_img, lane
        x2d = x_nchw.reshape(R, L)
        if rows_per_img > 1:
            sb = jnp.repeat(sb, rows_per_img, axis=0)      # (R, 2)
    else:
        R, L = B, P
        x2d = x_nchw.reshape(R, L)

    tr, tl = _pick_tiles(R, L, x2d.dtype)
    grid = (pl.cdiv(R, tr), pl.cdiv(L, tl))                # lanes innermost -> sb reuse

    itemsize = jnp.dtype(x2d.dtype).itemsize
    cost = pl.CostEstimate(
        flops=2 * R * L,
        transcendentals=0,
        bytes_accessed=2 * R * L * itemsize + 8 * R,
    )

    out2d = pl.pallas_call(
        _aug_layer_kernel,
        out_shape=jax.ShapeDtypeStruct((R, L), x_nchw.dtype),
        grid=grid,
        in_specs=[
            pl.BlockSpec((tr, 2), lambda i, j: (i, 0)),    # fused scale/bias
            pl.BlockSpec((tr, tl), lambda i, j: (i, j)),   # x slab
        ],
        out_specs=pl.BlockSpec((tr, tl), lambda i, j: (i, j)),
        compiler_params=pltpu.CompilerParams(
            dimension_semantics=("parallel", "parallel"),
            vmem_limit_bytes=32 * 1024 * 1024,
        ),
        cost_estimate=cost,
    )(sb, x2d)

    return out2d.reshape(B, C, H, W)


def _reference_forward(x_nchw, aug_oh, scales, biases):
    """Pure-JAX reference matching the PyTorch per-augmentation loop."""
    B = x_nchw.shape[0]
    one_hot = aug_oh
    if one_hot.ndim == 1:
        one_hot = jnp.broadcast_to(one_hot[None, :], (B, one_hot.shape[0]))
    one_hot = one_hot.astype(jnp.float32)
    xf = x_nchw.astype(jnp.float32)
    out = jnp.zeros_like(xf)
    for i in range(N_AUG):
        daug_out = scales[i] * xf + biases[i]
        out = out + one_hot[:, i].reshape(-1, 1, 1, 1) * daug_out
    return out.astype(x_nchw.dtype)


if __name__ == "__main__":
    key = jax.random.PRNGKey(0)
    k_x, k_idx, k_soft, k_x2, k_x3, k_idx3 = jax.random.split(key, 6)

    # Deterministic per-augmentation affine parameters.
    scales = jnp.array([1.0, 0.8, 1.2, 0.5], dtype=jnp.float32)
    biases = jnp.array([0.0, 0.1, -0.1, 0.05], dtype=jnp.float32)

    # --- Case 1: small module-consistent shape (B=2, C=4, H=W=16), f32 ------
    B, C, H, W = 2, 4, 16, 16
    x = jax.random.normal(k_x, (B, C, H, W), dtype=jnp.float32)
    aug_idx = jax.random.randint(k_idx, (B,), 0, N_AUG)
    aug_oh = jax.nn.one_hot(aug_idx, N_AUG, dtype=jnp.float32)
    soft_augs = jax.nn.softmax(jax.random.normal(k_soft, (B, N_AUG)), axis=-1)

    out = jax.block_until_ready(aug_layer_forward(x, aug_oh, soft_augs, scales, biases))
    ref = _reference_forward(x, aug_oh, scales, biases)
    assert out.shape == (B, C, H, W)
    assert jnp.allclose(out, ref, atol=1e-5, rtol=1e-5), "mismatch vs reference (case 1)"

    # --- Case 2: ragged batch, bf16, shared 1-D one-hot ----------------------
    B2, C2, H2, W2 = 10, 3, 32, 32
    x2 = jax.random.normal(k_x2, (B2, C2, H2, W2), dtype=jnp.bfloat16)
    aug_oh2 = jax.nn.one_hot(jnp.array(2), N_AUG, dtype=jnp.float32)     # (N_AUG,)
    soft2 = jnp.full((N_AUG,), 1.0 / N_AUG, dtype=jnp.float32)

    out2 = jax.block_until_ready(aug_layer_forward(x2, aug_oh2, soft2, scales, biases))
    ref2 = _reference_forward(x2, aug_oh2, scales, biases)
    assert jnp.allclose(out2.astype(jnp.float32), ref2.astype(jnp.float32),
                        atol=1e-2, rtol=1e-2), "mismatch vs reference (case 2)"

    # --- Case 3: small batch, large image -> lane-dense slab path ------------
    B3, C3, H3, W3 = 4, 1, 64, 256   # P = 16384 -> slab rows_per_img = 2
    x3 = jax.random.normal(k_x3, (B3, C3, H3, W3), dtype=jnp.float32)
    aug_idx3 = jax.random.randint(k_idx3, (B3,), 0, N_AUG)
    aug_oh3 = jax.nn.one_hot(aug_idx3, N_AUG, dtype=jnp.float32)
    soft3 = jnp.full((B3, N_AUG), 1.0 / N_AUG, dtype=jnp.float32)

    out3 = jax.block_until_ready(aug_layer_forward(x3, aug_oh3, soft3, scales, biases))
    ref3 = _reference_forward(x3, aug_oh3, scales, biases)
    assert jnp.allclose(out3, ref3, atol=1e-5, rtol=1e-5), "mismatch vs reference (case 3)"

    print("KERNEL_OK")
</pallas_src>

<mosaic_0001>
module attributes {stable_mosaic.version = 11 : i64} {
  func.func @_aug_layer_kernel(%arg0: i32, %arg1: i32, %arg2: memref<2x2xf32, #tpu.memory_space<vmem>>, %arg3: memref<2x1024xf32, #tpu.memory_space<vmem>>, %arg4: memref<2x1024xf32, #tpu.memory_space<vmem>>) attributes {dimension_semantics = [#tpu.dimension_semantics<parallel>, #tpu.dimension_semantics<parallel>], iteration_bounds = array<i64: 1, 1>, scalar_prefetch = 0 : i64, scratch_operands = 0 : i64, tpu.core_type = #tpu.core_type<tc>, window_params = [{transform_indices = @transform_0, window_bounds = array<i64: 2, 2>}, {transform_indices = @transform_1, window_bounds = array<i64: 2, 1024>}, {transform_indices = @transform_2, window_bounds = array<i64: 2, 1024>}]} {
    %c0 = arith.constant 0 : index
    %c0_0 = arith.constant 0 : index
    %0 = vector.load %arg2[%c0, %c0_0] : memref<2x2xf32, #tpu.memory_space<vmem>>, vector<2x1xf32>
    %c0_1 = arith.constant 0 : index
    %c1 = arith.constant 1 : index
    %1 = vector.load %arg2[%c0_1, %c1] : memref<2x2xf32, #tpu.memory_space<vmem>>, vector<2x1xf32>
    %c0_2 = arith.constant 0 : index
    %c0_3 = arith.constant 0 : index
    %2 = vector.load %arg3[%c0_2, %c0_3] : memref<2x1024xf32, #tpu.memory_space<vmem>>, vector<2x1024xf32>
    %3 = vector.broadcast %0 : vector<2x1xf32> to vector<2x1024xf32>
    %4 = arith.mulf %2, %3 : vector<2x1024xf32>
    %5 = vector.broadcast %1 : vector<2x1xf32> to vector<2x1024xf32>
    %6 = arith.addf %4, %5 : vector<2x1024xf32>
    %c0_4 = arith.constant 0 : index
    %c0_5 = arith.constant 0 : index
    %7 = vector.load %arg4[%c0_4, %c0_5] : memref<2x1024xf32, #tpu.memory_space<vmem>>, vector<2x1024xf32>
    tpu.vector_store %arg4[%c0_4, %c0_5], %6 {strides = array<i32>} : memref<2x1024xf32, #tpu.memory_space<vmem>>, vector<2x1024xf32>,
    return
  }
  func.func @transform_0(%arg0: i32, %arg1: i32) -> (i32, i32) {
    %c0_i32 = arith.constant 0 : i32
    %c0_i32_0 = arith.constant 0 : i32
    return %arg0, %c0_i32 : i32, i32
  }
  func.func @transform_1(%arg0: i32, %arg1: i32) -> (i32, i32) {
    %c0_i32 = arith.constant 0 : i32
    return %arg0, %arg1 : i32, i32
  }
  func.func @transform_2(%arg0: i32, %arg1: i32) -> (i32, i32) {
    %c0_i32 = arith.constant 0 : i32
    return %arg0, %arg1 : i32, i32
  }
}

</mosaic_0001>

<llo_original>
// kernel: tpu_custom_call.1
$region0: #{tpu_custom_call.1}
  #allocation0 [shape = 'u32[]', space=smem, size = 0x4, offset = 0x4, fixed_abs, tag = 'smem constant byte address 0x4 - core index']
  #allocation1 [shape = 'u32[72,128]{1,0:T(1,128)}', space=vmem, size = 0x9000, scoped, tag = 'internal scratch']
  %s0 = inlined_call_operand.hbm [shape: f32[2,2], index: 0, kind: input, shape index: {}]
  %s1 = inlined_call_operand.hbm [shape: f32[2,1024], index: 1, kind: input, shape index: {}]
  %s2 = inlined_call_operand.hbm [shape: f32[2,1024], index: 2, kind: output, shape index: {}]
  %s3 = sld [smem:[#allocation0]]
  $region26: #{tpu_custom_call.1} parent=0
    _
  %s5 = ssub.s32 1, %s3
  %s6 = scalar_select 0, %s5, %s3
  $region1: #{tpu_custom_call.1} parent=0
    #allocation2 [shape = 'u8[1024]{0}', space=vmem, size = 0x400, scoped, tag = 'input window, operand 0, single buffered']
    #allocation3 [shape = 's32[1]{0}', space=sflag, size = 0x4, scoped, tag = 'scoped memory for tpu_custom_call.1']
    #allocation4 [shape = 's32[1]{0}', space=sflag, size = 0x4, scoped, tag = 'scoped memory for tpu_custom_call.1']
    #allocation5 [shape = 'u8[8192]{0}', space=vmem, size = 0x2000, scoped, tag = 'input window, operand 1, single buffered']
    #allocation6 [shape = 's32[1]{0}', space=sflag, size = 0x4, scoped, tag = 'scoped memory for tpu_custom_call.1']
    #allocation7 [shape = 'u8[8192]{0}', space=vmem, size = 0x2000, scoped, tag = 'output window, operand 0, single buffered']
    %7 = vsyncpa [#allocation3], 0
    %8 = vsyncpa [#allocation6], 0
    %9 = vsyncpa [#allocation4], 0
    // Predicated region
    $region2: #{tpu_custom_call.1} parent=1 // pred_check
      _
    $region3: #{tpu_custom_call.1} parent=1 // pred_check_branch
      %11 = sbr.rel (0) target = $region5
    $region4: #{tpu_custom_call.1} parent=1 // pred_region
      %13 = vsyncadd [#allocation3], 0
      %s15 = sshll.u32 %s0, 4
      %s16 = int_to_ptr.hbm [resolvable:$true] %s15
      %s17 = sshll.u32 [#allocation2], 4
      %s18 = int_to_ptr.vmem [resolvable:$true] %s17
      %20 = dma.hbm_to_vmem [thread:$0]  %s16, 32, %s18, [#allocation3]
    $region5: #{tpu_custom_call.1} parent=1 // pred_fallthru
      _
    // Predicated region
    $region6: #{tpu_custom_call.1} parent=1 // pred_check
      _
    $region7: #{tpu_custom_call.1} parent=1 // pred_check_branch
      %22 = sbr.rel (0) target = $region9
    $region8: #{tpu_custom_call.1} parent=1 // pred_region
      %24 = vsyncadd [#allocation6], 0
      %s26 = sshll.u32 %s1, 4
      %s27 = int_to_ptr.hbm [resolvable:$true] %s26
      %s28 = sshll.u32 [#allocation5], 4
      %s29 = int_to_ptr.vmem [resolvable:$true] %s28
      %31 = dma.hbm_to_vmem [thread:$0]  %s27, 256, %s29, [#allocation6]
    $region9: #{tpu_custom_call.1} parent=1 // pred_fallthru
      _
    // Predicated region
    $region10: #{tpu_custom_call.1} parent=1 // pred_check
      _
    $region11: #{tpu_custom_call.1} parent=1 // pred_check_branch
      %33 = sbr.rel (0) target = $region13
    $region12: #{tpu_custom_call.1} parent=1 // pred_region
      %35 = dma.done [#allocation3], 32
    $region13: #{tpu_custom_call.1} parent=1 // pred_fallthru
      _
    // Predicated region
    $region14: #{tpu_custom_call.1} parent=1 // pred_check
      _
    $region15: #{tpu_custom_call.1} parent=1 // pred_check_branch
      %37 = sbr.rel (0) target = $region17
    $region16: #{tpu_custom_call.1} parent=1 // pred_region
      %39 = dma.done [#allocation6], 256
    $region17: #{tpu_custom_call.1} parent=1 // pred_fallthru
      _
    %v40 = vld [vmem:[#allocation2] sm:$0x3]
    %v41 = vld [vmem:[#allocation5] sm:$0xff]
    %v42 = vld [vmem:[#allocation5 + $0x8] sm:$0xff]
    %44 = vset.pattern.permute.xlu0 0
    %45 = vperm.xlu0 %44, %v40
    %v46 = vpop.permute.xlu0 %45
    %v48 = vunpack.c.l.s4 269488144
    %v49 = vunpack.c.0.s8 %v48
    %v50 = vperm.slane %v46, %v49
    %v52 = vmul.f32 %v41, %v50
    %v53 = vmul.f32 %v42, %v50
    %54 = vset.pattern.permute.xlu0 1
    %55 = vperm.xlu0 %54, %v40
    %v56 = vpop.permute.xlu0 %55
    %v58 = vunpack.c.l.s4 269488144
    %v59 = vunpack.c.0.s8 %v58
    %v60 = vperm.slane %v56, %v59
    %v62 = vadd.f32 %v52, %v60
    %v63 = vadd.f32 %v53, %v60
    %64 = vst [vmem:[#allocation7] sm:$0xff] %v62
    %65 = vst [vmem:[#allocation7 + $0x8] sm:$0xff] %v63
    // Predicated region
    $region18: #{tpu_custom_call.1} parent=1 // pred_check
      _
    $region19: #{tpu_custom_call.1} parent=1 // pred_check_branch
      %67 = sbr.rel (0) target = $region21
    $region20: #{tpu_custom_call.1} parent=1 // pred_region
      %69 = vsyncadd [#allocation4], 0
      %s71 = sshll.u32 [#allocation7], 4
      %s72 = int_to_ptr.vmem [resolvable:$true] %s71
      %s73 = sshll.u32 %s2, 4
      %s74 = int_to_ptr.hbm [resolvable:$true] %s73
      %76 = dma.vmem_to_hbm [thread:$0]  %s72, 256, %s74, [#allocation4]
    $region21: #{tpu_custom_call.1} parent=1 // pred_fallthru
      _
    // Predicated region
    $region22: #{tpu_custom_call.1} parent=1 // pred_check
      _
    $region23: #{tpu_custom_call.1} parent=1 // pred_check_branch
      %78 = sbr.rel (0) target = $region25
    $region24: #{tpu_custom_call.1} parent=1 // pred_region
      %80 = dma.done [#allocation4], 256
    $region25: #{tpu_custom_call.1} parent=1 // pred_fallthru
      _
    %81 = vsyncpa [#allocation3], 1
    %82 = vsyncpa [#allocation6], 1
    %83 = vsyncpa [#allocation4], 1

</llo_original>
